<compile_context>
chip_gen: v7x
topology: tpu7x:2x2x1
jax: 0.10.0
libtpu: 0.0.40
codegen_flags: <defaults>
</compile_context>

<pallas_src>
import math
import functools

import jax
import jax.numpy as jnp
from jax import lax
from jax.experimental import pallas as pl
from jax.experimental.pallas import tpu as pltpu


def _flash_attn_kernel(q_ref, k_ref, v_ref, o_ref, m_sc, l_sc, acc_sc, *,
                       k_tile, valid_len, padded_len):
    """One (batch, head, q-tile, k-tile) grid step of flash attention.

    q_ref: (1, 1, tq, hd)   k_ref / v_ref: (1, 1, tk, hd)   o_ref: (1, 1, tq, hd)
    Scratch persists across the innermost k-tile axis:
      m_sc (tq, 1) running max, l_sc (tq, 1) running denom, acc_sc (tq, hd) f32.
    """
    ki = pl.program_id(3)

    @pl.when(ki == 0)
    def _():
        m_sc[...] = jnp.full_like(m_sc, -1e30)
        l_sc[...] = jnp.zeros_like(l_sc)
        acc_sc[...] = jnp.zeros_like(acc_sc)

    q = q_ref[0, 0]                       # (tq, hd); softmax scale pre-folded
    k = k_ref[0, 0]                       # (tk, hd)
    v = v_ref[0, 0]                       # (tk, hd)

    # scores = q @ k^T without materializing a transpose: contract last dims.
    s = lax.dot_general(q, k, (((1,), (1,)), ((), ())),
                        preferred_element_type=jnp.float32)          # (tq, tk)

    if padded_len != valid_len:           # static: only emitted when S padded
        col = ki * k_tile + lax.broadcasted_iota(jnp.int32, s.shape, 1)
        s = jnp.where(col < valid_len, s, -1e30)

    # Online (numerically stable) softmax; normalization deferred to the end.
    m_prev = m_sc[...]
    m_new = jnp.maximum(m_prev, jnp.max(s, axis=-1, keepdims=True))  # (tq, 1)
    alpha = jnp.exp(m_prev - m_new)                                  # (tq, 1)
    p = jnp.exp(s - m_new)                                           # (tq, tk) f32
    l_sc[...] = alpha * l_sc[...] + jnp.sum(p, axis=-1, keepdims=True)
    acc_sc[...] = alpha * acc_sc[...] + jnp.dot(
        p.astype(v.dtype), v, preferred_element_type=jnp.float32)    # (tq, hd)
    m_sc[...] = m_new
    # dropout has p=0.0 in the reference -> identity, nothing to do.

    @pl.when(ki == pl.num_programs(3) - 1)
    def _():
        inv_l = pl.reciprocal(l_sc[...], approx=True)   # EUP slot, ~free
        o_ref[0, 0] = (acc_sc[...] * inv_l).astype(o_ref.dtype)


def _round_up(x, m):
    return (x + m - 1) // m * m


def attention_pallas(x, wq, wk, wv, wo, *, num_heads, q_block=256, k_block=256,
                     mxu_dtype=None):
    """Forward pass of the PyTorch Attention module.

    x: (B, S, H).  wq/wk/wv/wo: torch.nn.Linear weights of shape
    (out_features, in_features) = (H, H), bias-free.
    mxu_dtype: optional dtype for the MXU operands (pass jnp.bfloat16 on
    v6e/v7x when the model runs in f32).
    """
    B, S, H = x.shape
    assert H % num_heads == 0
    hd = H // num_heads
    out_dtype = x.dtype
    cdt = jnp.dtype(mxu_dtype) if mxu_dtype is not None else x.dtype

    # ---- Projections: plain XLA GEMMs, computed exactly once (review #1/#2).
    scale = 1.0 / math.sqrt(hd)
    xc = x.astype(cdt)
    q = jnp.dot(xc, wq.T.astype(cdt), preferred_element_type=jnp.float32) * scale
    k = jnp.dot(xc, wk.T.astype(cdt), preferred_element_type=jnp.float32)
    v = jnp.dot(xc, wv.T.astype(cdt), preferred_element_type=jnp.float32)

    def split_heads(t):                    # (B, S, H) -> (B, NH, S, hd)
        return t.reshape(B, S, num_heads, hd).transpose(0, 2, 1, 3).astype(cdt)

    q, k, v = split_heads(q), split_heads(k), split_heads(v)

    # ---- Tiling: pad S so every (tq, tk) block is full; mask padded keys.
    tq = min(q_block, _round_up(S, 8))
    tk = min(k_block, _round_up(S, 8))
    Sp = _round_up(S, math.lcm(tq, tk))
    if Sp != S:
        pad = ((0, 0), (0, 0), (0, Sp - S), (0, 0))
        q, k, v = jnp.pad(q, pad), jnp.pad(k, pad), jnp.pad(v, pad)
    nq, nk = Sp // tq, Sp // tk

    kernel = functools.partial(_flash_attn_kernel, k_tile=tk, valid_len=S,
                               padded_len=Sp)

    attn = pl.pallas_call(
        kernel,
        out_shape=jax.ShapeDtypeStruct((B, num_heads, Sp, hd), out_dtype),
        grid_spec=pltpu.PrefetchScalarGridSpec(
            num_scalar_prefetch=0,
            grid=(B, num_heads, nq, nk),        # reduction (k) axis last
            in_specs=[
                pl.BlockSpec((1, 1, tq, hd), lambda b, h, qi, ki: (b, h, qi, 0)),
                pl.BlockSpec((1, 1, tk, hd), lambda b, h, qi, ki: (b, h, ki, 0)),
                pl.BlockSpec((1, 1, tk, hd), lambda b, h, qi, ki: (b, h, ki, 0)),
            ],
            out_specs=pl.BlockSpec((1, 1, tq, hd),
                                   lambda b, h, qi, ki: (b, h, qi, 0)),
            scratch_shapes=[
                pltpu.VMEM((tq, 1), jnp.float32),    # running max
                pltpu.VMEM((tq, 1), jnp.float32),    # running denominator
                pltpu.VMEM((tq, hd), jnp.float32),   # f32 output accumulator
            ],
        ),
        compiler_params=pltpu.CompilerParams(
            # Batch, heads and q-tiles are all independent -> three parallel
            # axes; heads shard across the two v7x TensorCores even for B=1.
            dimension_semantics=("parallel", "parallel", "parallel",
                                 "arbitrary"),
        ),
    )(q, k, v)

    # ---- Merge heads and apply the output projection (one XLA GEMM).
    attn = attn[:, :, :S, :].transpose(0, 2, 1, 3).reshape(B, S, H)
    out = jnp.dot(attn.astype(cdt), wo.T.astype(cdt),
                  preferred_element_type=jnp.float32)
    return out.astype(out_dtype)


def attention_reference(x, wq, wk, wv, wo, *, num_heads):
    """Pure-JAX reference mirroring the PyTorch forward exactly."""
    B, S, H = x.shape
    hd = H // num_heads
    q = x @ wq.T
    k = x @ wk.T
    v = x @ wv.T
    q = q.reshape(B, S, num_heads, hd).transpose(0, 2, 1, 3)
    k = k.reshape(B, S, num_heads, hd).transpose(0, 2, 1, 3)
    v = v.reshape(B, S, num_heads, hd).transpose(0, 2, 1, 3)
    scores = jnp.einsum("bhqd,bhkd->bhqk", q, k) / math.sqrt(hd)
    p = jax.nn.softmax(scores, axis=-1)
    o = jnp.einsum("bhqk,bhkd->bhqd", p, v)
    o = o.transpose(0, 2, 1, 3).reshape(B, S, H)
    return o @ wo.T


if __name__ == "__main__":
    B, S, H, NH = 2, 8, 32, 4

    key = jax.random.PRNGKey(0)
    kx, kq, kk, kv, ko = jax.random.split(key, 5)

    x = jax.random.normal(kx, (B, S, H), dtype=jnp.float32)
    # torch.nn.Linear weight shape is (out_features, in_features) = (H, H)
    bound = 1.0 / math.sqrt(H)
    wq = jax.random.uniform(kq, (H, H), jnp.float32, -bound, bound)
    wk = jax.random.uniform(kk, (H, H), jnp.float32, -bound, bound)
    wv = jax.random.uniform(kv, (H, H), jnp.float32, -bound, bound)
    wo = jax.random.uniform(ko, (H, H), jnp.float32, -bound, bound)

    out = jax.block_until_ready(
        attention_pallas(x, wq, wk, wv, wo, num_heads=NH))
    ref = attention_reference(x, wq, wk, wv, wo, num_heads=NH)
    assert out.shape == (B, S, H)
    # approx=True reciprocal (EUP) bounds the otherwise-f32 accuracy at ~1e-3.
    assert jnp.allclose(out, ref, atol=2e-3, rtol=2e-3), "mismatch vs reference"

    # Exercise the padded-sequence / masked-key path (S not a tile multiple).
    S2 = 20
    x2 = jax.random.normal(kx, (B, S2, H), dtype=jnp.float32)
    out2 = jax.block_until_ready(
        attention_pallas(x2, wq, wk, wv, wo, num_heads=NH))
    ref2 = attention_reference(x2, wq, wk, wv, wo, num_heads=NH)
    assert jnp.allclose(out2, ref2, atol=2e-3, rtol=2e-3), "padded-path mismatch"

    # TODO(synk): for hd < 128 on v6e/v7x, pack several heads per grid step
    #             (batched dot_general) to widen the MXU feed further.
    print("KERNEL_OK")
</pallas_src>

<mosaic_0001>
module attributes {stable_mosaic.version = 11 : i64} {
  func.func @_flash_attn_kernel(%arg0: i32, %arg1: i32, %arg2: i32, %arg3: i32, %arg4: memref<1x1x8x8xf32, #tpu.memory_space<vmem>>, %arg5: memref<1x1x8x8xf32, #tpu.memory_space<vmem>>, %arg6: memref<1x1x8x8xf32, #tpu.memory_space<vmem>>, %arg7: memref<1x1x8x8xf32, #tpu.memory_space<vmem>>, %arg8: memref<8x1xf32, #tpu.memory_space<vmem>>, %arg9: memref<8x1xf32, #tpu.memory_space<vmem>>, %arg10: memref<8x8xf32, #tpu.memory_space<vmem>>) attributes {dimension_semantics = [#tpu.dimension_semantics<parallel>, #tpu.dimension_semantics<parallel>, #tpu.dimension_semantics<parallel>, #tpu.dimension_semantics<arbitrary>], iteration_bounds = array<i64: 2, 4, 1, 1>, scalar_prefetch = 0 : i64, scratch_operands = 3 : i64, tpu.core_type = #tpu.core_type<tc>, window_params = [{transform_indices = @transform_0, window_bounds = array<i64: 1, 1, 8, 8>}, {transform_indices = @transform_1, window_bounds = array<i64: 1, 1, 8, 8>}, {transform_indices = @transform_2, window_bounds = array<i64: 1, 1, 8, 8>}, {transform_indices = @transform_3, window_bounds = array<i64: 1, 1, 8, 8>}]} {
    %c0_i32 = arith.constant 0 : i32
    %0 = arith.cmpi eq, %arg3, %c0_i32 : i32
    %1 = arith.extui %0 : i1 to i32
    %c0_i32_0 = arith.constant 0 : i32
    %2 = arith.cmpi ne, %1, %c0_i32_0 : i32
    scf.if %2 {
      %cst_29 = arith.constant -1.000000e+30 : f32
      %35 = vector.broadcast %cst_29 : f32 to vector<8x1xf32>
      %c0_30 = arith.constant 0 : index
      %c0_31 = arith.constant 0 : index
      %36 = vector.load %arg8[%c0_30, %c0_31] : memref<8x1xf32, #tpu.memory_space<vmem>>, vector<8x1xf32>
      tpu.vector_store %arg8[%c0_30, %c0_31], %35 {strides = array<i32>} : memref<8x1xf32, #tpu.memory_space<vmem>>, vector<8x1xf32>,
      %cst_32 = arith.constant 0.000000e+00 : f32
      %37 = vector.broadcast %cst_32 : f32 to vector<8x1xf32>
      %c0_33 = arith.constant 0 : index
      %c0_34 = arith.constant 0 : index
      %38 = vector.load %arg9[%c0_33, %c0_34] : memref<8x1xf32, #tpu.memory_space<vmem>>, vector<8x1xf32>
      tpu.vector_store %arg9[%c0_33, %c0_34], %37 {strides = array<i32>} : memref<8x1xf32, #tpu.memory_space<vmem>>, vector<8x1xf32>,
      %cst_35 = arith.constant 0.000000e+00 : f32
      %39 = vector.broadcast %cst_35 : f32 to vector<8x8xf32>
      %c0_36 = arith.constant 0 : index
      %c0_37 = arith.constant 0 : index
      %40 = vector.load %arg10[%c0_36, %c0_37] : memref<8x8xf32, #tpu.memory_space<vmem>>, vector<8x8xf32>
      tpu.vector_store %arg10[%c0_36, %c0_37], %39 {strides = array<i32>} : memref<8x8xf32, #tpu.memory_space<vmem>>, vector<8x8xf32>,
    } else {
    }
    %c0 = arith.constant 0 : index
    %c0_1 = arith.constant 0 : index
    %c0_2 = arith.constant 0 : index
    %c0_3 = arith.constant 0 : index
    %3 = vector.load %arg4[%c0, %c0_1, %c0_2, %c0_3] : memref<1x1x8x8xf32, #tpu.memory_space<vmem>>, vector<1x1x8x8xf32>
    %4 = vector.shape_cast %3 : vector<1x1x8x8xf32> to vector<8x8xf32>
    %c0_4 = arith.constant 0 : index
    %c0_5 = arith.constant 0 : index
    %c0_6 = arith.constant 0 : index
    %c0_7 = arith.constant 0 : index
    %5 = vector.load %arg5[%c0_4, %c0_5, %c0_6, %c0_7] : memref<1x1x8x8xf32, #tpu.memory_space<vmem>>, vector<1x1x8x8xf32>
    %6 = vector.shape_cast %5 : vector<1x1x8x8xf32> to vector<8x8xf32>
    %c0_8 = arith.constant 0 : index
    %c0_9 = arith.constant 0 : index
    %c0_10 = arith.constant 0 : index
    %c0_11 = arith.constant 0 : index
    %7 = vector.load %arg6[%c0_8, %c0_9, %c0_10, %c0_11] : memref<1x1x8x8xf32, #tpu.memory_space<vmem>>, vector<1x1x8x8xf32>
    %8 = vector.shape_cast %7 : vector<1x1x8x8xf32> to vector<8x8xf32>
    %cst = arith.constant dense<0.000000e+00> : vector<8x8xf32>
    %9 = tpu.matmul %4, %6, %cst {dimension_numbers = #tpu.dot_dimension_numbers<[1], [1], [0], [0], [0, 0, 1, 0], [], []>} : vector<8x8xf32>, vector<8x8xf32>, vector<8x8xf32> -> vector<8x8xf32>
    %c0_12 = arith.constant 0 : index
    %c0_13 = arith.constant 0 : index
    %10 = vector.load %arg8[%c0_12, %c0_13] : memref<8x1xf32, #tpu.memory_space<vmem>>, vector<8x1xf32>
    %cst_14 = arith.constant dense<0xFF800000> : vector<8xf32>
    %11 = vector.multi_reduction <maximumf>, %9, %cst_14 [1] : vector<8x8xf32> to vector<8xf32>
    %12 = vector.shape_cast %11 : vector<8xf32> to vector<8x1xf32>
    %13 = arith.maximumf %10, %12 : vector<8x1xf32>
    %14 = arith.subf %10, %13 : vector<8x1xf32>
    %15 = math.exp %14 : vector<8x1xf32>
    %16 = vector.broadcast %13 : vector<8x1xf32> to vector<8x8xf32>
    %17 = arith.subf %9, %16 : vector<8x8xf32>
    %18 = math.exp %17 : vector<8x8xf32>
    %c0_15 = arith.constant 0 : index
    %c0_16 = arith.constant 0 : index
    %19 = vector.load %arg9[%c0_15, %c0_16] : memref<8x1xf32, #tpu.memory_space<vmem>>, vector<8x1xf32>
    %20 = arith.mulf %15, %19 : vector<8x1xf32>
    %cst_17 = arith.constant dense<0.000000e+00> : vector<8xf32>
    %21 = vector.multi_reduction <add>, %18, %cst_17 [1] : vector<8x8xf32> to vector<8xf32>
    %22 = vector.shape_cast %21 : vector<8xf32> to vector<8x1xf32>
    %23 = arith.addf %20, %22 : vector<8x1xf32>
    %c0_18 = arith.constant 0 : index
    %c0_19 = arith.constant 0 : index
    %24 = vector.load %arg9[%c0_18, %c0_19] : memref<8x1xf32, #tpu.memory_space<vmem>>, vector<8x1xf32>
    tpu.vector_store %arg9[%c0_18, %c0_19], %23 {strides = array<i32>} : memref<8x1xf32, #tpu.memory_space<vmem>>, vector<8x1xf32>,
    %c0_20 = arith.constant 0 : index
    %c0_21 = arith.constant 0 : index
    %25 = vector.load %arg10[%c0_20, %c0_21] : memref<8x8xf32, #tpu.memory_space<vmem>>, vector<8x8xf32>
    %26 = vector.broadcast %15 : vector<8x1xf32> to vector<8x8xf32>
    %27 = arith.mulf %26, %25 : vector<8x8xf32>
    %cst_22 = arith.constant dense<0.000000e+00> : vector<8x8xf32>
    %28 = tpu.matmul %18, %8, %cst_22 {dimension_numbers = #tpu.dot_dimension_numbers<[1], [0], [0], [1], [0, 0, 1, 1], [], []>} : vector<8x8xf32>, vector<8x8xf32>, vector<8x8xf32> -> vector<8x8xf32>
    %29 = arith.addf %27, %28 : vector<8x8xf32>
    %c0_23 = arith.constant 0 : index
    %c0_24 = arith.constant 0 : index
    %30 = vector.load %arg10[%c0_23, %c0_24] : memref<8x8xf32, #tpu.memory_space<vmem>>, vector<8x8xf32>
    tpu.vector_store %arg10[%c0_23, %c0_24], %29 {strides = array<i32>} : memref<8x8xf32, #tpu.memory_space<vmem>>, vector<8x8xf32>,
    %c0_25 = arith.constant 0 : index
    %c0_26 = arith.constant 0 : index
    %31 = vector.load %arg8[%c0_25, %c0_26] : memref<8x1xf32, #tpu.memory_space<vmem>>, vector<8x1xf32>
    tpu.vector_store %arg8[%c0_25, %c0_26], %13 {strides = array<i32>} : memref<8x1xf32, #tpu.memory_space<vmem>>, vector<8x1xf32>,
    %c0_i32_27 = arith.constant 0 : i32
    %32 = arith.cmpi eq, %arg3, %c0_i32_27 : i32
    %33 = arith.extui %32 : i1 to i32
    %c0_i32_28 = arith.constant 0 : i32
    %34 = arith.cmpi ne, %33, %c0_i32_28 : i32
    scf.if %34 {
      %c0_29 = arith.constant 0 : index
      %c0_30 = arith.constant 0 : index
      %35 = vector.load %arg9[%c0_29, %c0_30] : memref<8x1xf32, #tpu.memory_space<vmem>>, vector<8x1xf32>
      %36 = tpu.reciprocal %35 {approx = true} : vector<8x1xf32> -> vector<8x1xf32>
      %c0_31 = arith.constant 0 : index
      %c0_32 = arith.constant 0 : index
      %37 = vector.load %arg10[%c0_31, %c0_32] : memref<8x8xf32, #tpu.memory_space<vmem>>, vector<8x8xf32>
      %38 = vector.broadcast %36 : vector<8x1xf32> to vector<8x8xf32>
      %39 = arith.mulf %37, %38 : vector<8x8xf32>
      %c0_33 = arith.constant 0 : index
      %c0_34 = arith.constant 0 : index
      %c0_35 = arith.constant 0 : index
      %c0_36 = arith.constant 0 : index
      %40 = vector.load %arg7[%c0_33, %c0_34, %c0_35, %c0_36] : memref<1x1x8x8xf32, #tpu.memory_space<vmem>>, vector<1x1x8x8xf32>
      %41 = vector.shape_cast %40 : vector<1x1x8x8xf32> to vector<8x8xf32>
      %42 = vector.shape_cast %39 : vector<8x8xf32> to vector<1x1x8x8xf32>
      tpu.vector_store %arg7[%c0_33, %c0_34, %c0_35, %c0_36], %42 {strides = array<i32>} : memref<1x1x8x8xf32, #tpu.memory_space<vmem>>, vector<1x1x8x8xf32>,
    } else {
    }
    return
  }
  func.func @transform_0(%arg0: i32, %arg1: i32, %arg2: i32, %arg3: i32) -> (i32, i32, i32, i32) {
    %c0_i32 = arith.constant 0 : i32
    %c0_i32_0 = arith.constant 0 : i32
    return %arg0, %arg1, %arg2, %c0_i32 : i32, i32, i32, i32
  }
  func.func @transform_1(%arg0: i32, %arg1: i32, %arg2: i32, %arg3: i32) -> (i32, i32, i32, i32) {
    %c0_i32 = arith.constant 0 : i32
    %c0_i32_0 = arith.constant 0 : i32
    return %arg0, %arg1, %arg3, %c0_i32 : i32, i32, i32, i32
  }
  func.func @transform_2(%arg0: i32, %arg1: i32, %arg2: i32, %arg3: i32) -> (i32, i32, i32, i32) {
    %c0_i32 = arith.constant 0 : i32
    %c0_i32_0 = arith.constant 0 : i32
    return %arg0, %arg1, %arg3, %c0_i32 : i32, i32, i32, i32
  }
  func.func @transform_3(%arg0: i32, %arg1: i32, %arg2: i32, %arg3: i32) -> (i32, i32, i32, i32) {
    %c0_i32 = arith.constant 0 : i32
    %c0_i32_0 = arith.constant 0 : i32
    return %arg0, %arg1, %arg2, %c0_i32 : i32, i32, i32, i32
  }
}

</mosaic_0001>

<llo_original>
// kernel: tpu_custom_call.1
$region0: #{tpu_custom_call.1}
  #allocation0 [shape = 'u32[]', space=smem, size = 0x4, offset = 0x4, fixed_abs, tag = 'smem constant byte address 0x4 - core index']
  #allocation1 [shape = 'u32[144,128]{1,0:T(1,128)}', space=vmem, size = 0x12000, scoped, tag = 'internal scratch']
  #allocation2 [shape = 'f32[8,1]{1,0:T(8,128)}', space=vmem, size = 0x1000, scoped, tag = 'scratch operand']
  #allocation3 [shape = 'f32[8,1]{1,0:T(8,128)}', space=vmem, size = 0x1000, scoped, tag = 'scratch operand']
  #allocation4 [shape = 'f32[8,8]{1,0:T(8,128)}', space=vmem, size = 0x1000, scoped, tag = 'scratch operand']
  %s0 = inlined_call_operand.hbm [shape: f32[2,4,8,8], index: 0, kind: input, shape index: {}]
  %s1 = inlined_call_operand.hbm [shape: f32[2,4,8,8], index: 1, kind: input, shape index: {}]
  %s2 = inlined_call_operand.hbm [shape: f32[2,4,8,8], index: 2, kind: input, shape index: {}]
  %s3 = inlined_call_operand.hbm [shape: f32[2,4,8,8], index: 3, kind: output, shape index: {}]
  %s4 = sld [smem:[#allocation0]]
  $region65: #{tpu_custom_call.1} parent=0
    _
  %s6 = ssub.s32 1, %s4
  %s7 = scalar_select 0, %s6, %s4
  $region1: #{tpu_custom_call.1} parent=0
    #allocation5 [shape = 'u8[8192]{0}', space=vmem, size = 0x2000, scoped, tag = 'input window, operand 0']
    #allocation6 [shape = 's32[2]{0}', space=sflag, size = 0x8, scoped, tag = 'scoped memory for tpu_custom_call.1']
    #allocation7 [shape = 's32[2]{0}', space=sflag, size = 0x8, scoped, tag = 'scoped memory for tpu_custom_call.1']
    #allocation8 [shape = 'u8[8192]{0}', space=vmem, size = 0x2000, scoped, tag = 'input window, operand 1']
    #allocation9 [shape = 's32[2]{0}', space=sflag, size = 0x8, scoped, tag = 'scoped memory for tpu_custom_call.1']
    #allocation10 [shape = 'u8[8192]{0}', space=vmem, size = 0x2000, scoped, tag = 'input window, operand 2']
    #allocation11 [shape = 'u8[8192]{0}', space=vmem, size = 0x2000, scoped, tag = 'output window, operand 0']
    %8 = vsyncpa [#allocation6], 0
    %s9 = scalar_lea.sflag [#allocation6], 1
    %10 = vsyncpa %s9, 0
    %11 = vsyncpa [#allocation9], 0
    %s12 = scalar_lea.sflag [#allocation9], 1
    %13 = vsyncpa %s12, 0
    %14 = vsyncpa [#allocation7], 0
    %s15 = scalar_lea.sflag [#allocation7], 1
    %16 = vsyncpa %s15, 0
    loop: start=0, step=1, limit=10
    $region2: #{tpu_custom_call.1} parent=1 // loop_pre_header
      _
    $region3: #{tpu_custom_call.1} parent=1 // loop_header
      %s18 = sphi 0, %s22
      %p19 = scmp.ge.s32.totalorder %s18, 10
      %s25 = sphi 0, %s51
      %s26 = sphi 0, %s47
      %s27 = sphi 0, %s43
      %s28 = sphi 0, %s39
      %s29 = sphi 0, %s25
      %s30 = sphi 0, %s26
      %s31 = sphi 0, %s27
      %s32 = sphi 0, %s28
      %s33 = sphi 0, %s29
      %s34 = sphi 0, %s30
      %s35 = sphi 0, %s31
      %s36 = sphi 0, %s32
      %s58 = sphi 0, %s60
      %s61 = sphi 0, %s58
      %s62 = sphi 0, %s61
      %s78 = sphi 0, %s62
      %s88 = sphi 0, %s90
      %s91 = sphi 0, %s88
      %s92 = sphi 0, %s91
      %s108 = sphi 0, %s92
      %s118 = sphi 0, %s120
      %s121 = sphi 0, %s118
      %s122 = sphi 0, %s121
      %s138 = sphi 0, %s122
      %s148 = sphi 0, %s150
      %s151 = sphi 0, %s148
      %s152 = sphi 0, %s151
      %s168 = sphi 0, %s152
    $region4: #{tpu_custom_call.1} parent=1 // loop_header_branch
      %21 = sbr.rel (%p19) target = $region8
    $region5: #{tpu_custom_call.1} parent=1 // loop_body
      %s23 = ssub.s32 %s18, 1
      %s24 = ssub.s32 %s18, 2
      %s37 = sadd.s32 1, %s28
      %p38 = scmp.ge.s32.totalorder %s37, 1
      %s39 = scalar_select %p38, 0, %s37
      %s40 = sadd.s32 1, %s27
      %s41 = scalar_select %p38, %s40, %s27
      %p42 = scmp.ge.s32.totalorder %s41, 1
      %s43 = scalar_select %p42, 0, %s41
      %s44 = sadd.s32 1, %s26
      %s45 = scalar_select %p42, %s44, %s26
      %p46 = scmp.ge.s32.totalorder %s45, 4
      %s47 = scalar_select %p46, 0, %s45
      %s48 = sadd.s32 1, %s25
      %s49 = scalar_select %p46, %s48, %s25
      %p50 = scmp.ge.s32.totalorder %s49, 2
      %s51 = scalar_select %p50, 0, %s49
      %s52 = ssub.s32 %s25, %s51
      %s53 = ssub.s32 %s26, %s47
      %s54 = sor.u32 %s52, %s53
      %s55 = ssub.s32 %s27, %s43
      %s56 = sor.u32 %s54, %s55
      %p57 = scmp.eq.s32.totalorder %s56, 0
      %s59 = sadd.s32 %s58, 1
      %s60 = scalar_select %p57, %s58, %s59
      %p63 = pneg %p57
      %p64 = scmp.eq.s32.totalorder %s18, 7
      %p65 = por %p63, %p64
      %p66 = scmp.ne.s32.totalorder %s58, %s61
      %p67 = scmp.eq.s32.totalorder %s18, 0
      %p68 = por %p66, %p67
      %p69 = scmp.ne.s32.totalorder %s58, %s61
      %p70 = scmp.eq.s32.totalorder %s23, 7
      %p71 = por %p69, %p70
      %p72 = scmp.ne.s32.totalorder %s61, %s62
      %p73 = scmp.eq.s32.totalorder %s23, 0
      %p74 = por %p72, %p73
      %p75 = scmp.ne.s32.totalorder %s61, %s62
      %p76 = scmp.eq.s32.totalorder %s24, 7
      %p77 = por %p75, %p76
      %p79 = scmp.ne.s32.totalorder %s62, %s78
      %p80 = scmp.eq.s32.totalorder %s24, 0
      %p81 = por %p79, %p80
      %s82 = ssub.s32 %s25, %s51
      %s83 = ssub.s32 %s26, %s47
      %s84 = sor.u32 %s82, %s83
      %s85 = ssub.s32 %s28, %s39
      %s86 = sor.u32 %s84, %s85
      %p87 = scmp.eq.s32.totalorder %s86, 0
      %s89 = sadd.s32 %s88, 1
      %s90 = scalar_select %p87, %s88, %s89
      %p93 = pneg %p87
      %p94 = scmp.eq.s32.totalorder %s18, 7
      %p95 = por %p93, %p94
      %p96 = scmp.ne.s32.totalorder %s88, %s91
      %p97 = scmp.eq.s32.totalorder %s18, 0
      %p98 = por %p96, %p97
      %p99 = scmp.ne.s32.totalorder %s88, %s91
      %p100 = scmp.eq.s32.totalorder %s23, 7
      %p101 = por %p99, %p100
      %p102 = scmp.ne.s32.totalorder %s91, %s92
      %p103 = scmp.eq.s32.totalorder %s23, 0
      %p104 = por %p102, %p103
      %p105 = scmp.ne.s32.totalorder %s91, %s92
      %p106 = scmp.eq.s32.totalorder %s24, 7
      %p107 = por %p105, %p106
      %p109 = scmp.ne.s32.totalorder %s92, %s108
      %p110 = scmp.eq.s32.totalorder %s24, 0
      %p111 = por %p109, %p110
      %s112 = ssub.s32 %s25, %s51
      %s113 = ssub.s32 %s26, %s47
      %s114 = sor.u32 %s112, %s113
      %s115 = ssub.s32 %s28, %s39
      %s116 = sor.u32 %s114, %s115
      %p117 = scmp.eq.s32.totalorder %s116, 0
      %s119 = sadd.s32 %s118, 1
      %s120 = scalar_select %p117, %s118, %s119
      %p123 = pneg %p117
      %p124 = scmp.eq.s32.totalorder %s18, 7
      %p125 = por %p123, %p124
      %p126 = scmp.ne.s32.totalorder %s118, %s121
      %p127 = scmp.eq.s32.totalorder %s18, 0
      %p128 = por %p126, %p127
      %p129 = scmp.ne.s32.totalorder %s118, %s121
      %p130 = scmp.eq.s32.totalorder %s23, 7
      %p131 = por %p129, %p130
      %p132 = scmp.ne.s32.totalorder %s121, %s122
      %p133 = scmp.eq.s32.totalorder %s23, 0
      %p134 = por %p132, %p133
      %p135 = scmp.ne.s32.totalorder %s121, %s122
      %p136 = scmp.eq.s32.totalorder %s24, 7
      %p137 = por %p135, %p136
      %p139 = scmp.ne.s32.totalorder %s122, %s138
      %p140 = scmp.eq.s32.totalorder %s24, 0
      %p141 = por %p139, %p140
      %s142 = ssub.s32 %s25, %s51
      %s143 = ssub.s32 %s26, %s47
      %s144 = sor.u32 %s142, %s143
      %s145 = ssub.s32 %s27, %s43
      %s146 = sor.u32 %s144, %s145
      %p147 = scmp.eq.s32.totalorder %s146, 0
      %s149 = sadd.s32 %s148, 1
      %s150 = scalar_select %p147, %s148, %s149
      %p153 = pneg %p147
      %p154 = scmp.eq.s32.totalorder %s18, 7
      %p155 = por %p153, %p154
      %p156 = scmp.ne.s32.totalorder %s148, %s151
      %p157 = scmp.eq.s32.totalorder %s18, 0
      %p158 = por %p156, %p157
      %p159 = scmp.ne.s32.totalorder %s148, %s151
      %p160 = scmp.eq.s32.totalorder %s23, 7
      %p161 = por %p159, %p160
      %p162 = scmp.ne.s32.totalorder %s151, %s152
      %p163 = scmp.eq.s32.totalorder %s23, 0
      %p164 = por %p162, %p163
      %p165 = scmp.ne.s32.totalorder %s151, %s152
      %p166 = scmp.eq.s32.totalorder %s24, 7
      %p167 = por %p165, %p166
      %p169 = scmp.ne.s32.totalorder %s152, %s168
      %p170 = scmp.eq.s32.totalorder %s24, 0
      %p171 = por %p169, %p170
      %p172 = scmp.le.s32.totalorder 1, %s18
      %p173 = scmp.lt.s32.totalorder %s18, 9
      %p174 = pnand %p172, %p173
      %p175 = pneg %p174
      // Predicated region
      $region9: #{tpu_custom_call.1} parent=5 // pred_check
        _
      $region10: #{tpu_custom_call.1} parent=5 // pred_check_branch
        %177 = sbr.rel (%p174) target = $region12
      $region11: #{tpu_custom_call.1} parent=5 // pred_region
        %s178 = ssub.s32 %s18, 1
      $region12: #{tpu_custom_call.1} parent=5 // pred_fallthru
        _
      %p179 = scmp.lt.s32.totalorder %s18, 8
      // Predicated region
      $region13: #{tpu_custom_call.1} parent=5 // pred_check
        %p180 = pneg %p179
      $region14: #{tpu_custom_call.1} parent=5 // pred_check_branch
        %182 = sbr.rel (%p180) target = $region16
      $region15: #{tpu_custom_call.1} parent=5 // pred_region
        // Predicated region
        $region17: #{tpu_custom_call.1} parent=15 // pred_check
          %p183 = pneg %p68
        $region18: #{tpu_custom_call.1} parent=15 // pred_check_branch
          %185 = sbr.rel (%p183) target = $region20
        $region19: #{tpu_custom_call.1} parent=15 // pred_region
          %s186 = sand.u32 %s58, 1
          %s187 = scalar_lea.sflag [#allocation6], %s186
          %s188 = sand.u32 %s58, 1
          %s189 = smul.addr %s188, 8
          %s190 = scalar_lea.vmem [#allocation5], %s189
          %s192 = ssub.s32 128, 128
          %193 = vsyncadd %s187, %s192
          %s194 = sadd.s32 %s27, %s26
          %s195 = smul.addr %s25, 4
          %s196 = sadd.s32 %s194, %s195
          %s197 = smul.addr %s196, 128
          %s198 = scalar_lea.hbm %s0, %s197
          %s200 = sshll.u32 %s190, 4
          %s201 = int_to_ptr.vmem [resolvable:$true] %s200
          %203 = dma.hbm_to_vmem [thread:$0]  %s198, 128, %s201, %s187
        $region20: #{tpu_custom_call.1} parent=15 // pred_fallthru
          _
        // Predicated region
        $region21: #{tpu_custom_call.1} parent=15 // pred_check
          %p204 = pneg %p98
        $region22: #{tpu_custom_call.1} parent=15 // pred_check_branch
          %206 = sbr.rel (%p204) target = $region24
        $region23: #{tpu_custom_call.1} parent=15 // pred_region
          %s207 = sand.u32 %s18, 1
          %s208 = scalar_lea.sflag [#allocation9], %s207
          %s209 = sand.u32 %s88, 1
          %s210 = smul.addr %s209, 8
          %s211 = scalar_lea.vmem [#allocation8], %s210
          %s213 = ssub.s32 128, 128
          %214 = vsyncadd %s208, %s213
          %s215 = sadd.s32 %s28, %s26
          %s216 = smul.addr %s25, 4
          %s217 = sadd.s32 %s215, %s216
          %s218 = smul.addr %s217, 128
          %s219 = scalar_lea.hbm %s1, %s218
          %s221 = sshll.u32 %s211, 4
          %s222 = int_to_ptr.vmem [resolvable:$true] %s221
          %224 = dma.hbm_to_vmem [thread:$0]  %s219, 128, %s222, %s208
        $region24: #{tpu_custom_call.1} parent=15 // pred_fallthru
          _
        // Predicated region
        $region25: #{tpu_custom_call.1} parent=15 // pred_check
          %p225 = pneg %p128
        $region26: #{tpu_custom_call.1} parent=15 // pred_check_branch
          %227 = sbr.rel (%p225) target = $region28
        $region27: #{tpu_custom_call.1} parent=15 // pred_region
          %s228 = sand.u32 %s18, 1
          %s229 = scalar_lea.sflag [#allocation9], %s228
          %s230 = sand.u32 %s118, 1
          %s231 = smul.addr %s230, 8
          %s232 = scalar_lea.vmem [#allocation10], %s231
          %s234 = ssub.s32 128, 128
          %235 = vsyncadd %s229, %s234
          %s236 = sadd.s32 %s28, %s26
          %s237 = smul.addr %s25, 4
          %s238 = sadd.s32 %s236, %s237
          %s239 = smul.addr %s238, 128
          %s240 = scalar_lea.hbm %s2, %s239
          %s242 = sshll.u32 %s232, 4
          %s243 = int_to_ptr.vmem [resolvable:$true] %s242
          %245 = dma.hbm_to_vmem [thread:$0]  %s240, 128, %s243, %s229
        $region28: #{tpu_custom_call.1} parent=15 // pred_fallthru
          _
      $region16: #{tpu_custom_call.1} parent=5 // pred_fallthru
        _
      %p246 = scmp.le.s32.totalorder 1, %s18
      %p247 = scmp.lt.s32.totalorder %s18, 9
      %p248 = pnand %p246, %p247
      %p249 = pneg %p248
      // Predicated region
      $region29: #{tpu_custom_call.1} parent=5 // pred_check
        _
      $region30: #{tpu_custom_call.1} parent=5 // pred_check_branch
        %251 = sbr.rel (%p248) target = $region32
      $region31: #{tpu_custom_call.1} parent=5 // pred_region
        %s252 = ssub.s32 %s18, 1
        %s253 = sand.u32 %s61, 1
        %s254 = scalar_lea.sflag [#allocation6], %s253
        %s255 = sand.u32 %s61, 1
        %s256 = smul.addr %s255, 8
        %s257 = scalar_lea.vmem [#allocation5], %s256
        // Predicated region
        $region33: #{tpu_custom_call.1} parent=31 // pred_check
          %p258 = pneg %p74
        $region34: #{tpu_custom_call.1} parent=31 // pred_check_branch
          %260 = sbr.rel (%p258) target = $region36
        $region35: #{tpu_custom_call.1} parent=31 // pred_region
          %261 = dma.done %s254, 128
        $region36: #{tpu_custom_call.1} parent=31 // pred_fallthru
          _
        %s262 = sand.u32 %s23, 1
        %s263 = scalar_lea.sflag [#allocation9], %s262
        %s264 = sand.u32 %s91, 1
        %s265 = smul.addr %s264, 8
        %s266 = scalar_lea.vmem [#allocation8], %s265
        // Predicated region
        $region37: #{tpu_custom_call.1} parent=31 // pred_check
          %p267 = pneg %p104
        $region38: #{tpu_custom_call.1} parent=31 // pred_check_branch
          %269 = sbr.rel (%p267) target = $region40
        $region39: #{tpu_custom_call.1} parent=31 // pred_region
          %270 = dma.done %s263, 128
        $region40: #{tpu_custom_call.1} parent=31 // pred_fallthru
          _
        %s271 = sand.u32 %s23, 1
        %s272 = scalar_lea.sflag [#allocation9], %s271
        %s273 = sand.u32 %s121, 1
        %s274 = smul.addr %s273, 8
        %s275 = scalar_lea.vmem [#allocation10], %s274
        // Predicated region
        $region41: #{tpu_custom_call.1} parent=31 // pred_check
          %p276 = pneg %p134
        $region42: #{tpu_custom_call.1} parent=31 // pred_check_branch
          %278 = sbr.rel (%p276) target = $region44
        $region43: #{tpu_custom_call.1} parent=31 // pred_region
          %279 = dma.done %s272, 128
        $region44: #{tpu_custom_call.1} parent=31 // pred_fallthru
          _
        %s280 = sand.u32 %s61, 1
        %s281 = scalar_lea.sflag [#allocation6], %s280
        %s282 = sand.u32 %s61, 1
        %s283 = smul.addr %s282, 8
        %s284 = scalar_lea.vmem [#allocation5], %s283
        %p285 = pneg %p74
        %p286 = pneg %p71
        %s287 = sand.u32 %s23, 1
        %s288 = scalar_lea.sflag [#allocation9], %s287
        %s289 = sand.u32 %s91, 1
        %s290 = smul.addr %s289, 8
        %s291 = scalar_lea.vmem [#allocation8], %s290
        %p292 = pneg %p104
        %p293 = pneg %p101
        %s294 = sand.u32 %s23, 1
        %s295 = scalar_lea.sflag [#allocation9], %s294
        %s296 = sand.u32 %s121, 1
        %s297 = smul.addr %s296, 8
        %s298 = scalar_lea.vmem [#allocation10], %s297
        %p299 = pneg %p134
        %p300 = pneg %p131
        %p301 = pneg %p164
        %p302 = pneg %p161
        %s303 = sand.u32 %s151, 1
        %s304 = scalar_lea.sflag [#allocation7], %s303
        %s305 = sand.u32 %s151, 1
        %s306 = smul.addr %s305, 8
        %s307 = scalar_lea.vmem [#allocation11], %s306
        %p308 = scmp.eq.s32.totalorder %s32, 0
        // Predicated region
        $region45: #{tpu_custom_call.1} parent=31 // pred_check
          %p309 = pneg %p308
        $region46: #{tpu_custom_call.1} parent=31 // pred_check_branch
          %311 = sbr.rel (%p309) target = $region48
        $region47: #{tpu_custom_call.1} parent=31 // pred_region
          %vm312 = vcmask 7168
          %313 = vst.msk [vmem:[#allocation2] sm:$0xff] %vm312, -1e+30
          %314 = vst.msk [vmem:[#allocation3] sm:$0xff] %vm312, 0.0
          %vm315 = vcmask 64512
          %316 = vst.msk [vmem:[#allocation4] sm:$0xff] %vm315, 0.0
        $region48: #{tpu_custom_call.1} parent=31 // pred_fallthru
          _
        %v317 = vld [vmem:[%s257] sm:$0xff]
        %v318 = vld [vmem:[%s266] sm:$0xff]
        %v319 = vld [vmem:[%s275] sm:$0xff]
        %vm320 = vcmask 64512
        %v322 = vsel %vm320, %v317, 0
        %v325 = vsel %vm320, %v318, 0
        %327 = vmatprep.subr.mxu0 0.0
        %328 = vmatpush1.xpose.msra.mxu0 %v325
        %329 = vmatprep.subr.mxu0 0.0
        %330 = vmatpush1.xpose.msra.mxu0 0.0
        %331 = vmatprep.subr.mxu0 0.0
        %332 = vmatpush1.xpose.msra.mxu0 0.0
        %333 = vmatprep.subr.mxu0 0.0
        %334 = vmatpush1.xpose.msra.mxu0 0.0
        %335 = vmatprep.subr.mxu0 0.0
        %336 = vmatpush1.xpose.msra.mxu0 0.0
        %337 = vmatprep.subr.mxu0 0.0
        %338 = vmatpush1.xpose.msra.mxu0 0.0
        %339 = vmatprep.subr.mxu0 0.0
        %340 = vmatpush1.xpose.msra.mxu0 0.0
        %341 = vmatprep.subr.mxu0 0.0
        %342 = vmatpush1.xpose.msra.mxu0 0.0
        %343 = vmatprep.subr.mxu0 0.0
        %344 = vmatpush1.xpose.msra.mxu0 0.0
        %345 = vmatprep.subr.mxu0 0.0
        %346 = vmatpush1.xpose.msra.mxu0 0.0
        %347 = vmatprep.subr.mxu0 0.0
        %348 = vmatpush1.xpose.msra.mxu0 0.0
        %349 = vmatprep.subr.mxu0 0.0
        %350 = vmatpush1.xpose.msra.mxu0 0.0
        %351 = vmatprep.subr.mxu0 0.0
        %352 = vmatpush1.xpose.msra.mxu0 0.0
        %353 = vmatprep.subr.mxu0 0.0
        %354 = vmatpush1.xpose.msra.mxu0 0.0
        %355 = vmatprep.subr.mxu0 0.0
        %356 = vmatpush1.xpose.msra.mxu0 0.0
        %357 = vmatprep.subr.mxu0 0.0
        %358 = vmatpush1.xpose.msra.mxu0 0.0
        %359 = vmatprep.subr.mxu0 0.0
        %360 = vmatpush1.xpose.msra.mxu0 0.0
        %361 = vmatprep.subr.mxu0 0.0
        %362 = vmatpush1.xpose.msra.mxu0 0.0
        %363 = vmatprep.subr.mxu0 0.0
        %364 = vmatpush1.xpose.msra.mxu0 0.0
        %365 = vmatprep.subr.mxu0 0.0
        %366 = vmatpush1.xpose.msra.mxu0 0.0
        %367 = vmatprep.subr.mxu0 0.0
        %368 = vmatpush1.xpose.msra.mxu0 0.0
        %369 = vmatprep.subr.mxu0 0.0
        %370 = vmatpush1.xpose.msra.mxu0 0.0
        %371 = vmatprep.subr.mxu0 0.0
        %372 = vmatpush1.xpose.msra.mxu0 0.0
        %373 = vmatprep.subr.mxu0 0.0
        %374 = vmatpush1.xpose.msra.mxu0 0.0
        %375 = vmatprep.subr.mxu0 0.0
        %376 = vmatpush1.xpose.msra.mxu0 0.0
        %377 = vmatprep.subr.mxu0 0.0
        %378 = vmatpush1.xpose.msra.mxu0 0.0
        %379 = vmatprep.subr.mxu0 0.0
        %380 = vmatpush1.xpose.msra.mxu0 0.0
        %381 = vmatprep.subr.mxu0 0.0
        %382 = vmatpush1.xpose.msra.mxu0 0.0
        %383 = vmatprep.subr.mxu0 0.0
        %384 = vmatpush1.xpose.msra.mxu0 0.0
        %385 = vmatprep.subr.mxu0 0.0
        %386 = vmatpush1.xpose.msra.mxu0 0.0
        %387 = vmatprep.subr.mxu0 0.0
        %388 = vmatpush1.xpose.msra.mxu0 0.0
        %389 = vmatprep.subr.mxu0 0.0
        %390 = vmatpush1.xpose.msra.mxu0 0.0
        %391 = vmatprep.mubr.f32.mxu0 0.0
        %392 = vmatmul.mubr.f32.gmra.mrb[0].mxu0 %v322
        %v393 = vpop.f32.mrb[0].mxu0
        %v394 = vadd.f32 0.0, %v393
        %v395 = vpop.f32.mrb[0].mxu0
        %396 = vdwg.mxu0
        %v397 = vld [vmem:[#allocation2] sm:$0xff]
        %v398 = vsel %vm320, %v394, -inf
        %399 = vmax.xlane.f32.xlu0 %v398
        %v400 = vpop.xlane.xlu0 %399
        %v401 = vmax.f32 %v397, %v400
        %v402 = vsub.f32 %v397, %v401
        %v403 = vmul.f32 %v402, 1.442695
        %v404 = vpow.pop %v403
        %406 = vset.pattern.permute.xlu0 0
        %407 = vperm.xlu0 %406, %v401
        %v408 = vpop.permute.xlu0 %407
        %v410 = vsub.f32 %v394, %v408
        %v411 = vmul.f32 %v410, 1.442695
        %v412 = vpow.pop %v411
        %v413 = vld [vmem:[#allocation3] sm:$0xff]
        %v414 = vmul.f32 %v404, %v413
        %v415 = vsel %vm320, %v412, 0.0
        %416 = vadd.xlane.f32.xlu0 %v415
        %v417 = vpop.xlane.xlu0 %416
        %v418 = vadd.f32 %v414, %v417
        %vm419 = vcmask 7168
        %420 = vst.msk [vmem:[#allocation3] sm:$0xff] %vm419, %v418
        %v421 = vld [vmem:[#allocation4] sm:$0xff]
        %423 = vset.pattern.permute.xlu0 0
        %424 = vperm.xlu0 %423, %v404
        %v425 = vpop.permute.xlu0 %424
        %v427 = vmul.f32 %v425, %v421
        %v429 = vsel %vm320, %v412, 0
        %431 = vmatprep.subr.mxu0 0.0
        %432 = vmatpush1.msra.mxu0 %v319
        %433 = vmatprep.subr.mxu0 0.0
        %434 = vmatpush1.msra.mxu0 0.0
        %435 = vmatprep.subr.mxu0 0.0
        %436 = vmatpush1.msra.mxu0 0.0
        %437 = vmatprep.subr.mxu0 0.0
        %438 = vmatpush1.msra.mxu0 0.0
        %439 = vmatprep.subr.mxu0 0.0
        %440 = vmatpush1.msra.mxu0 0.0
        %441 = vmatprep.subr.mxu0 0.0
        %442 = vmatpush1.msra.mxu0 0.0
        %443 = vmatprep.subr.mxu0 0.0
        %444 = vmatpush1.msra.mxu0 0.0
        %445 = vmatprep.subr.mxu0 0.0
        %446 = vmatpush1.msra.mxu0 0.0
        %447 = vmatprep.subr.mxu0 0.0
        %448 = vmatpush1.msra.mxu0 0.0
        %449 = vmatprep.subr.mxu0 0.0
        %450 = vmatpush1.msra.mxu0 0.0
        %451 = vmatprep.subr.mxu0 0.0
        %452 = vmatpush1.msra.mxu0 0.0
        %453 = vmatprep.subr.mxu0 0.0
        %454 = vmatpush1.msra.mxu0 0.0
        %455 = vmatprep.subr.mxu0 0.0
        %456 = vmatpush1.msra.mxu0 0.0
        %457 = vmatprep.subr.mxu0 0.0
        %458 = vmatpush1.msra.mxu0 0.0
        %459 = vmatprep.subr.mxu0 0.0
        %460 = vmatpush1.msra.mxu0 0.0
        %461 = vmatprep.subr.mxu0 0.0
        %462 = vmatpush1.msra.mxu0 0.0
        %463 = vmatprep.subr.mxu0 0.0
        %464 = vmatpush1.msra.mxu0 0.0
        %465 = vmatprep.subr.mxu0 0.0
        %466 = vmatpush1.msra.mxu0 0.0
        %467 = vmatprep.subr.mxu0 0.0
        %468 = vmatpush1.msra.mxu0 0.0
        %469 = vmatprep.subr.mxu0 0.0
        %470 = vmatpush1.msra.mxu0 0.0
        %471 = vmatprep.subr.mxu0 0.0
        %472 = vmatpush1.msra.mxu0 0.0
        %473 = vmatprep.subr.mxu0 0.0
        %474 = vmatpush1.msra.mxu0 0.0
        %475 = vmatprep.subr.mxu0 0.0
        %476 = vmatpush1.msra.mxu0 0.0
        %477 = vmatprep.subr.mxu0 0.0
        %478 = vmatpush1.msra.mxu0 0.0
        %479 = vmatprep.subr.mxu0 0.0
        %480 = vmatpush1.msra.mxu0 0.0
        %481 = vmatprep.subr.mxu0 0.0
        %482 = vmatpush1.msra.mxu0 0.0
        %483 = vmatprep.subr.mxu0 0.0
        %484 = vmatpush1.msra.mxu0 0.0
        %485 = vmatprep.subr.mxu0 0.0
        %486 = vmatpush1.msra.mxu0 0.0
        %487 = vmatprep.subr.mxu0 0.0
        %488 = vmatpush1.msra.mxu0 0.0
        %489 = vmatprep.subr.mxu0 0.0
        %490 = vmatpush1.msra.mxu0 0.0
        %491 = vmatprep.subr.mxu0 0.0
        %492 = vmatpush1.msra.mxu0 0.0
        %493 = vmatprep.subr.mxu0 0.0
        %494 = vmatpush1.msra.mxu0 0.0
        %495 = vmatprep.mubr.f32.mxu0 0.0
        %496 = vmatmul.mubr.f32.gmra.mrb[0].mxu0 %v429
        %v497 = vpop.f32.mrb[0].mxu0
        %v498 = vadd.f32 0.0, %v497
        %v499 = vpop.f32.mrb[0].mxu0
        %500 = vdwg.mxu0
        %v501 = vadd.f32 %v427, %v498
        %502 = vst.msk [vmem:[#allocation4] sm:$0xff] %vm320, %v501
        %503 = vst.msk [vmem:[#allocation2] sm:$0xff] %vm419, %v401
        // Predicated region
        $region49: #{tpu_custom_call.1} parent=31 // pred_check
          %p504 = pneg %p308
        $region50: #{tpu_custom_call.1} parent=31 // pred_check_branch
          %506 = sbr.rel (%p504) target = $region52
        $region51: #{tpu_custom_call.1} parent=31 // pred_region
          %v507 = vld [vmem:[#allocation3] sm:$0xff]
          %v508 = vrcp.pop %v507
          %v509 = vld [vmem:[#allocation4] sm:$0xff]
          %511 = vset.pattern.permute.xlu0 0
          %512 = vperm.xlu0 %511, %v508
          %v513 = vpop.permute.xlu0 %512
          %v515 = vmul.f32 %v509, %v513
          %516 = vst.msk [vmem:[%s307] sm:$0xff] %vm320, %v515
        $region52: #{tpu_custom_call.1} parent=31 // pred_fallthru
          _
        %s517 = sand.u32 %s151, 1
        %s518 = scalar_lea.sflag [#allocation7], %s517
        %s519 = sand.u32 %s151, 1
        %s520 = smul.addr %s519, 8
        %s521 = scalar_lea.vmem [#allocation11], %s520
        // Predicated region
        $region53: #{tpu_custom_call.1} parent=31 // pred_check
          %p522 = pneg %p161
        $region54: #{tpu_custom_call.1} parent=31 // pred_check_branch
          %524 = sbr.rel (%p522) target = $region56
        $region55: #{tpu_custom_call.1} parent=31 // pred_region
          %s526 = ssub.s32 128, 128
          %527 = vsyncadd %s518, %s526
          %s528 = sadd.s32 %s31, %s30
          %s529 = smul.addr %s29, 4
          %s530 = sadd.s32 %s528, %s529
          %s531 = smul.addr %s530, 128
          %s532 = scalar_lea.hbm %s3, %s531
          %s534 = sshll.u32 %s521, 4
          %s535 = int_to_ptr.vmem [resolvable:$true] %s534
          %537 = dma.vmem_to_hbm [thread:$0]  %s535, 128, %s532, %s518
        $region56: #{tpu_custom_call.1} parent=31 // pred_fallthru
          _
      $region32: #{tpu_custom_call.1} parent=5 // pred_fallthru
        _
      %p538 = scmp.le.s32.totalorder 2, %s18
      // Predicated region
      $region57: #{tpu_custom_call.1} parent=5 // pred_check
        %p539 = pneg %p538
      $region58: #{tpu_custom_call.1} parent=5 // pred_check_branch
        %541 = sbr.rel (%p539) target = $region60
      $region59: #{tpu_custom_call.1} parent=5 // pred_region
        %s542 = ssub.s32 %s18, 2
        // Predicated region
        $region61: #{tpu_custom_call.1} parent=59 // pred_check
          %p543 = pneg %p167
        $region62: #{tpu_custom_call.1} parent=59 // pred_check_branch
          %545 = sbr.rel (%p543) target = $region64
        $region63: #{tpu_custom_call.1} parent=59 // pred_region
          %s546 = sand.u32 %s152, 1
          %s547 = scalar_lea.sflag [#allocation7], %s546
          %s548 = sand.u32 %s152, 1
          %s549 = smul.addr %s548, 8
          %s550 = scalar_lea.vmem [#allocation11], %s549
          %551 = dma.done %s547, 128
        $region64: #{tpu_custom_call.1} parent=59 // pred_fallthru
          _
      $region60: #{tpu_custom_call.1} parent=5 // pred_fallthru
        _
    $region6: #{tpu_custom_call.1} parent=1 // loop_footer
      %s22 = sadd.s32 1, %s18
    $region7: #{tpu_custom_call.1} parent=1 // loop_footer_branch
      %17 = sbr.rel target = $region3
    $region8: #{tpu_custom_call.1} parent=1 // loop_exit
      _
    %552 = vsyncpa [#allocation6], 1
    %s553 = scalar_lea.sflag [#allocation6], 1
    %554 = vsyncpa %s553, 1
    %555 = vsyncpa [#allocation9], 1
    %s556 = scalar_lea.sflag [#allocation9], 1
    %557 = vsyncpa %s556, 1
    %558 = vsyncpa [#allocation7], 1
    %s559 = scalar_lea.sflag [#allocation7], 1
    %560 = vsyncpa %s559, 1

</llo_original>
